<compile_context>
chip_gen: v6e
topology: v6e:2x2x1
jax: 0.10.0
libtpu: 0.0.40
codegen_flags: <defaults>
</compile_context>

<pallas_src>
import jax
import jax.numpy as jnp
from jax.experimental import pallas as pl
from jax.experimental.pallas import tpu as pltpu

_LANES = 128
_BM_MAX = 1024          # rows (sublanes) per tile; sweep 512/1024/2048
_NUM_CORE_SPLITS = 2    # leading "parallel" grid axis (megacore on v7x)


def _to_2d(x):
    """Flatten to (-1, 128); minimal zero tail pad only when not 1024-aligned."""
    flat = x.reshape(-1)
    n = flat.shape[0]
    chunk = 8 * _LANES
    pad = (-n) % chunk
    if pad:
        # TODO(synk): fully copy-free tail handling (1-D BlockSpec + in-kernel
        # element mask) if non-1024-aligned element counts ever matter.
        flat = jnp.pad(flat, (0, pad))
    return flat.reshape(-1, _LANES)


def aod_loss(aod_true, aod_pred):
    """Pallas implementation of AoDLoss.forward. Returns a scalar float32."""
    assert aod_true.shape == aod_pred.shape
    N = aod_true.shape[0]

    t2d = _to_2d(aod_true)
    p2d = _to_2d(aod_pred)
    m_rows = t2d.shape[0]                       # multiple of 8 by construction

    bm = min(_BM_MAX, m_rows)                   # block rows (multiple of 8)
    num_blocks = pl.cdiv(m_rows, bm)
    n_cores = _NUM_CORE_SPLITS if num_blocks >= _NUM_CORE_SPLITS else 1
    steps_per_core = pl.cdiv(num_blocks, n_cores)

    def in_index_map(c, i):
        # Clamp so overshoot steps still address a valid block; the kernel
        # masks such steps out entirely using the *unclamped* row offset.
        return (jnp.minimum(c * steps_per_core + i, num_blocks - 1), 0)

    def kernel(t_ref, p_ref, out_ref):
        c = pl.program_id(0)
        i = pl.program_id(1)

        @pl.when(i == 0)
        def _():
            out_ref[...] = jnp.zeros(out_ref.shape, out_ref.dtype)

        # Unclamped global row offset of this step; mask invalid rows.
        row0 = (c * steps_per_core + i) * bm
        rows_valid = m_rows - row0              # may be <= 0 or > bm
        row_ids = jax.lax.broadcasted_iota(jnp.int32, (bm, _LANES), 0)
        mask = row_ids < rows_valid

        t = jnp.where(mask, t_ref[...].astype(jnp.float32), 0.0)
        p = jnp.where(mask, p_ref[...].astype(jnp.float32), 0.0)

        def tile_sum(x):                        # (bm,128) -> (8,128), VPU adds
            return jnp.sum(x.reshape(bm // 8, 8, _LANES), axis=0)

        out_ref[0] += tile_sum(t)
        out_ref[1] += tile_sum(p)
        out_ref[2] += tile_sum(t * p)
        out_ref[3] += tile_sum(t * t)
        out_ref[4] += tile_sum(p * p)

    partials = pl.pallas_call(
        kernel,
        out_shape=jax.ShapeDtypeStruct((n_cores, 5, 8, _LANES), jnp.float32),
        grid_spec=pltpu.PrefetchScalarGridSpec(
            num_scalar_prefetch=0,
            grid=(n_cores, steps_per_core),
            in_specs=[
                pl.BlockSpec((bm, _LANES), in_index_map),
                pl.BlockSpec((bm, _LANES), in_index_map),
            ],
            # Squeeze the per-core leading dim so the kernel sees (5, 8, 128).
            out_specs=pl.BlockSpec((None, 5, 8, _LANES),
                                   lambda c, i: (c, 0, 0, 0)),
        ),
        compiler_params=pltpu.CompilerParams(
            dimension_semantics=("parallel", "arbitrary")),
    )(t2d, p2d)

    # Single final cross-core / cross-sublane / cross-lane reduction in glue.
    sums = jnp.sum(partials, axis=(0, 2, 3))    # (5,)
    sum_true, sum_pred, sum_tp, sq_sum_true, sq_sum_pred = (
        sums[0], sums[1], sums[2], sums[3], sums[4])

    Nf = jnp.float32(N)
    num = Nf * sum_tp - sum_true * sum_pred
    den = jnp.sqrt((Nf * sq_sum_true - sum_true ** 2)
                   * (Nf * sq_sum_pred - sum_pred ** 2))
    pearson_r = num / (den + jnp.float32(1e-8))
    return pearson_r


def _reference(aod_true, aod_pred):
    # Pure-JAX reference mirroring the PyTorch forward exactly.
    N = aod_true.shape[0]
    sum_true = jnp.sum(aod_true)
    sum_pred = jnp.sum(aod_pred)
    sum_tp = jnp.sum(aod_true * aod_pred)
    sq_true = jnp.sum(aod_true ** 2)
    sq_pred = jnp.sum(aod_pred ** 2)
    num = N * sum_tp - sum_true * sum_pred
    den = jnp.sqrt((N * sq_true - sum_true ** 2) * (N * sq_pred - sum_pred ** 2))
    return num / (den + 1e-08)


if __name__ == "__main__":
    key = jax.random.PRNGKey(0)
    k1, k2 = jax.random.split(key)
    # NCHW-shaped AOD maps: batch=2, channels=4, spatial=16x16
    aod_true = jax.random.uniform(k1, (2, 4, 16, 16), dtype=jnp.float32)
    aod_pred = jax.random.uniform(k2, (2, 4, 16, 16), dtype=jnp.float32)

    out = jax.block_until_ready(aod_loss(aod_true, aod_pred))
    ref = jax.block_until_ready(_reference(aod_true, aod_pred))

    assert jnp.allclose(out, ref, rtol=1e-4, atol=1e-4), (out, ref)
    print("KERNEL_OK")
</pallas_src>

<mosaic_0001>
module attributes {stable_mosaic.version = 11 : i64} {
  func.func @kernel(%arg0: i32, %arg1: i32, %arg2: memref<16x128xf32, #tpu.memory_space<vmem>>, %arg3: memref<16x128xf32, #tpu.memory_space<vmem>>, %arg4: memref<1x5x8x128xf32, #tpu.memory_space<vmem>>) attributes {dimension_semantics = [#tpu.dimension_semantics<parallel>, #tpu.dimension_semantics<arbitrary>], iteration_bounds = array<i64: 1, 1>, scalar_prefetch = 0 : i64, scratch_operands = 0 : i64, tpu.core_type = #tpu.core_type<tc>, window_params = [{transform_indices = @transform_0, window_bounds = array<i64: 16, 128>}, {transform_indices = @transform_1, window_bounds = array<i64: 16, 128>}, {transform_indices = @transform_2, window_bounds = array<i64: 1, 5, 8, 128>}]} {
    %c0_i32 = arith.constant 0 : i32
    %0 = arith.cmpi eq, %arg1, %c0_i32 : i32
    %1 = arith.extui %0 : i1 to i32
    %c0_i32_0 = arith.constant 0 : i32
    %2 = arith.cmpi ne, %1, %c0_i32_0 : i32
    scf.if %2 {
      %cst_47 = arith.constant 0.000000e+00 : f32
      %59 = vector.broadcast %cst_47 : f32 to vector<5x8x128xf32>
      %c0_48 = arith.constant 0 : index
      %c0_49 = arith.constant 0 : index
      %c0_50 = arith.constant 0 : index
      %c0_51 = arith.constant 0 : index
      %60 = vector.load %arg4[%c0_48, %c0_49, %c0_50, %c0_51] : memref<1x5x8x128xf32, #tpu.memory_space<vmem>>, vector<1x5x8x128xf32>
      %61 = vector.shape_cast %60 : vector<1x5x8x128xf32> to vector<5x8x128xf32>
      %62 = vector.shape_cast %59 : vector<5x8x128xf32> to vector<1x5x8x128xf32>
      tpu.vector_store %arg4[%c0_48, %c0_49, %c0_50, %c0_51], %62 {strides = array<i32>} : memref<1x5x8x128xf32, #tpu.memory_space<vmem>>, vector<1x5x8x128xf32>,
    } else {
    }
    %c1_i32 = arith.constant 1 : i32
    %3 = arith.muli %arg0, %c1_i32 : i32
    %4 = arith.addi %3, %arg1 : i32
    %c16_i32 = arith.constant 16 : i32
    %5 = arith.muli %4, %c16_i32 : i32
    %c16_i32_1 = arith.constant 16 : i32
    %6 = arith.subi %c16_i32_1, %5 : i32
    %7 = tpu.iota {dimensions = array<i32: 0>} : vector<16x128xi32>
    %8 = vector.broadcast %6 : i32 to vector<16x128xi32>
    %9 = arith.cmpi slt, %7, %8 : vector<16x128xi32>
    %c0 = arith.constant 0 : index
    %c0_2 = arith.constant 0 : index
    %10 = vector.load %arg2[%c0, %c0_2] : memref<16x128xf32, #tpu.memory_space<vmem>>, vector<16x128xf32>
    %cst = arith.constant 0.000000e+00 : f32
    %11 = vector.broadcast %cst : f32 to vector<16x128xf32>
    %12 = arith.select %9, %10, %11 : vector<16x128xi1>, vector<16x128xf32>
    %c0_3 = arith.constant 0 : index
    %c0_4 = arith.constant 0 : index
    %13 = vector.load %arg3[%c0_3, %c0_4] : memref<16x128xf32, #tpu.memory_space<vmem>>, vector<16x128xf32>
    %cst_5 = arith.constant 0.000000e+00 : f32
    %14 = vector.broadcast %cst_5 : f32 to vector<16x128xf32>
    %15 = arith.select %9, %13, %14 : vector<16x128xi1>, vector<16x128xf32>
    %c0_6 = arith.constant 0 : index
    %c0_7 = arith.constant 0 : index
    %c0_8 = arith.constant 0 : index
    %c0_9 = arith.constant 0 : index
    %16 = vector.load %arg4[%c0_6, %c0_7, %c0_8, %c0_9] : memref<1x5x8x128xf32, #tpu.memory_space<vmem>>, vector<1x1x8x128xf32>
    %17 = vector.shape_cast %16 : vector<1x1x8x128xf32> to vector<8x128xf32>
    %18 = vector.shape_cast %12 : vector<16x128xf32> to vector<2x8x128xf32>
    %cst_10 = arith.constant dense<0.000000e+00> : vector<8x128xf32>
    %19 = vector.multi_reduction <add>, %18, %cst_10 [0] : vector<2x8x128xf32> to vector<8x128xf32>
    %20 = arith.addf %17, %19 : vector<8x128xf32>
    %c0_11 = arith.constant 0 : index
    %c0_12 = arith.constant 0 : index
    %c0_13 = arith.constant 0 : index
    %c0_14 = arith.constant 0 : index
    %21 = vector.load %arg4[%c0_11, %c0_12, %c0_13, %c0_14] : memref<1x5x8x128xf32, #tpu.memory_space<vmem>>, vector<1x1x8x128xf32>
    %22 = vector.shape_cast %21 : vector<1x1x8x128xf32> to vector<8x128xf32>
    %23 = vector.shape_cast %20 : vector<8x128xf32> to vector<1x1x8x128xf32>
    tpu.vector_store %arg4[%c0_11, %c0_12, %c0_13, %c0_14], %23 {strides = array<i32>} : memref<1x5x8x128xf32, #tpu.memory_space<vmem>>, vector<1x1x8x128xf32>,
    %c0_15 = arith.constant 0 : index
    %c1 = arith.constant 1 : index
    %c0_16 = arith.constant 0 : index
    %c0_17 = arith.constant 0 : index
    %24 = vector.load %arg4[%c0_15, %c1, %c0_16, %c0_17] : memref<1x5x8x128xf32, #tpu.memory_space<vmem>>, vector<1x1x8x128xf32>
    %25 = vector.shape_cast %24 : vector<1x1x8x128xf32> to vector<8x128xf32>
    %26 = vector.shape_cast %15 : vector<16x128xf32> to vector<2x8x128xf32>
    %cst_18 = arith.constant dense<0.000000e+00> : vector<8x128xf32>
    %27 = vector.multi_reduction <add>, %26, %cst_18 [0] : vector<2x8x128xf32> to vector<8x128xf32>
    %28 = arith.addf %25, %27 : vector<8x128xf32>
    %c0_19 = arith.constant 0 : index
    %c1_20 = arith.constant 1 : index
    %c0_21 = arith.constant 0 : index
    %c0_22 = arith.constant 0 : index
    %29 = vector.load %arg4[%c0_19, %c1_20, %c0_21, %c0_22] : memref<1x5x8x128xf32, #tpu.memory_space<vmem>>, vector<1x1x8x128xf32>
    %30 = vector.shape_cast %29 : vector<1x1x8x128xf32> to vector<8x128xf32>
    %31 = vector.shape_cast %28 : vector<8x128xf32> to vector<1x1x8x128xf32>
    tpu.vector_store %arg4[%c0_19, %c1_20, %c0_21, %c0_22], %31 {strides = array<i32>} : memref<1x5x8x128xf32, #tpu.memory_space<vmem>>, vector<1x1x8x128xf32>,
    %c0_23 = arith.constant 0 : index
    %c2 = arith.constant 2 : index
    %c0_24 = arith.constant 0 : index
    %c0_25 = arith.constant 0 : index
    %32 = vector.load %arg4[%c0_23, %c2, %c0_24, %c0_25] : memref<1x5x8x128xf32, #tpu.memory_space<vmem>>, vector<1x1x8x128xf32>
    %33 = vector.shape_cast %32 : vector<1x1x8x128xf32> to vector<8x128xf32>
    %34 = arith.mulf %12, %15 : vector<16x128xf32>
    %35 = vector.shape_cast %34 : vector<16x128xf32> to vector<2x8x128xf32>
    %cst_26 = arith.constant dense<0.000000e+00> : vector<8x128xf32>
    %36 = vector.multi_reduction <add>, %35, %cst_26 [0] : vector<2x8x128xf32> to vector<8x128xf32>
    %37 = arith.addf %33, %36 : vector<8x128xf32>
    %c0_27 = arith.constant 0 : index
    %c2_28 = arith.constant 2 : index
    %c0_29 = arith.constant 0 : index
    %c0_30 = arith.constant 0 : index
    %38 = vector.load %arg4[%c0_27, %c2_28, %c0_29, %c0_30] : memref<1x5x8x128xf32, #tpu.memory_space<vmem>>, vector<1x1x8x128xf32>
    %39 = vector.shape_cast %38 : vector<1x1x8x128xf32> to vector<8x128xf32>
    %40 = vector.shape_cast %37 : vector<8x128xf32> to vector<1x1x8x128xf32>
    tpu.vector_store %arg4[%c0_27, %c2_28, %c0_29, %c0_30], %40 {strides = array<i32>} : memref<1x5x8x128xf32, #tpu.memory_space<vmem>>, vector<1x1x8x128xf32>,
    %c0_31 = arith.constant 0 : index
    %c3 = arith.constant 3 : index
    %c0_32 = arith.constant 0 : index
    %c0_33 = arith.constant 0 : index
    %41 = vector.load %arg4[%c0_31, %c3, %c0_32, %c0_33] : memref<1x5x8x128xf32, #tpu.memory_space<vmem>>, vector<1x1x8x128xf32>
    %42 = vector.shape_cast %41 : vector<1x1x8x128xf32> to vector<8x128xf32>
    %43 = arith.mulf %12, %12 : vector<16x128xf32>
    %44 = vector.shape_cast %43 : vector<16x128xf32> to vector<2x8x128xf32>
    %cst_34 = arith.constant dense<0.000000e+00> : vector<8x128xf32>
    %45 = vector.multi_reduction <add>, %44, %cst_34 [0] : vector<2x8x128xf32> to vector<8x128xf32>
    %46 = arith.addf %42, %45 : vector<8x128xf32>
    %c0_35 = arith.constant 0 : index
    %c3_36 = arith.constant 3 : index
    %c0_37 = arith.constant 0 : index
    %c0_38 = arith.constant 0 : index
    %47 = vector.load %arg4[%c0_35, %c3_36, %c0_37, %c0_38] : memref<1x5x8x128xf32, #tpu.memory_space<vmem>>, vector<1x1x8x128xf32>
    %48 = vector.shape_cast %47 : vector<1x1x8x128xf32> to vector<8x128xf32>
    %49 = vector.shape_cast %46 : vector<8x128xf32> to vector<1x1x8x128xf32>
    tpu.vector_store %arg4[%c0_35, %c3_36, %c0_37, %c0_38], %49 {strides = array<i32>} : memref<1x5x8x128xf32, #tpu.memory_space<vmem>>, vector<1x1x8x128xf32>,
    %c0_39 = arith.constant 0 : index
    %c4 = arith.constant 4 : index
    %c0_40 = arith.constant 0 : index
    %c0_41 = arith.constant 0 : index
    %50 = vector.load %arg4[%c0_39, %c4, %c0_40, %c0_41] : memref<1x5x8x128xf32, #tpu.memory_space<vmem>>, vector<1x1x8x128xf32>
    %51 = vector.shape_cast %50 : vector<1x1x8x128xf32> to vector<8x128xf32>
    %52 = arith.mulf %15, %15 : vector<16x128xf32>
    %53 = vector.shape_cast %52 : vector<16x128xf32> to vector<2x8x128xf32>
    %cst_42 = arith.constant dense<0.000000e+00> : vector<8x128xf32>
    %54 = vector.multi_reduction <add>, %53, %cst_42 [0] : vector<2x8x128xf32> to vector<8x128xf32>
    %55 = arith.addf %51, %54 : vector<8x128xf32>
    %c0_43 = arith.constant 0 : index
    %c4_44 = arith.constant 4 : index
    %c0_45 = arith.constant 0 : index
    %c0_46 = arith.constant 0 : index
    %56 = vector.load %arg4[%c0_43, %c4_44, %c0_45, %c0_46] : memref<1x5x8x128xf32, #tpu.memory_space<vmem>>, vector<1x1x8x128xf32>
    %57 = vector.shape_cast %56 : vector<1x1x8x128xf32> to vector<8x128xf32>
    %58 = vector.shape_cast %55 : vector<8x128xf32> to vector<1x1x8x128xf32>
    tpu.vector_store %arg4[%c0_43, %c4_44, %c0_45, %c0_46], %58 {strides = array<i32>} : memref<1x5x8x128xf32, #tpu.memory_space<vmem>>, vector<1x1x8x128xf32>,
    return
  }
  func.func @transform_0(%arg0: i32, %arg1: i32) -> (i32, i32) {
    %c1_i32 = arith.constant 1 : i32
    %0 = arith.muli %arg0, %c1_i32 : i32
    %1 = arith.addi %0, %arg1 : i32
    %c0_i32 = arith.constant 0 : i32
    %2 = arith.minsi %1, %c0_i32 : i32
    %c0_i32_0 = arith.constant 0 : i32
    %c0_i32_1 = arith.constant 0 : i32
    return %2, %c0_i32_0 : i32, i32
  }
  func.func @transform_1(%arg0: i32, %arg1: i32) -> (i32, i32) {
    %c1_i32 = arith.constant 1 : i32
    %0 = arith.muli %arg0, %c1_i32 : i32
    %1 = arith.addi %0, %arg1 : i32
    %c0_i32 = arith.constant 0 : i32
    %2 = arith.minsi %1, %c0_i32 : i32
    %c0_i32_0 = arith.constant 0 : i32
    %c0_i32_1 = arith.constant 0 : i32
    return %2, %c0_i32_0 : i32, i32
  }
  func.func @transform_2(%arg0: i32, %arg1: i32) -> (i32, i32, i32, i32) {
    %c0_i32 = arith.constant 0 : i32
    %c0_i32_0 = arith.constant 0 : i32
    %c0_i32_1 = arith.constant 0 : i32
    %c0_i32_2 = arith.constant 0 : i32
    return %arg0, %c0_i32, %c0_i32_0, %c0_i32_1 : i32, i32, i32, i32
  }
}

</mosaic_0001>

<llo_original>
// kernel: tpu_custom_call.1
$region0: #{tpu_custom_call.1}
  #allocation0 [shape = 'u32[]', space=smem, size = 0x4, offset = 0x4, fixed_abs, tag = 'smem constant byte address 0x4 - core index']
  #allocation1 [shape = 'u32[144,128]{1,0:T(1,128)}', space=vmem, size = 0x12000, scoped, tag = 'internal scratch']
  %s0 = inlined_call_operand.hbm [shape: f32[16,128], index: 0, kind: input, shape index: {}]
  %s1 = inlined_call_operand.hbm [shape: f32[16,128], index: 1, kind: input, shape index: {}]
  %s2 = inlined_call_operand.hbm [shape: f32[1,5,8,128], index: 2, kind: output, shape index: {}]
  %s3 = sld [smem:[#allocation0]]
  $region30: #{tpu_custom_call.1} parent=0
    _
  %s5 = ssub.s32 1, %s3
  %s6 = scalar_select 0, %s5, %s3
  $region1: #{tpu_custom_call.1} parent=0
    #allocation2 [shape = 'u8[8192]{0}', space=vmem, size = 0x2000, scoped, tag = 'input window, operand 0, single buffered']
    #allocation3 [shape = 's32[1]{0}', space=sflag, size = 0x4, scoped, tag = 'scoped memory for tpu_custom_call.1']
    #allocation4 [shape = 's32[1]{0}', space=sflag, size = 0x4, scoped, tag = 'scoped memory for tpu_custom_call.1']
    #allocation5 [shape = 'u8[8192]{0}', space=vmem, size = 0x2000, scoped, tag = 'input window, operand 1, single buffered']
    #allocation6 [shape = 's32[1]{0}', space=sflag, size = 0x4, scoped, tag = 'scoped memory for tpu_custom_call.1']
    #allocation7 [shape = 'u8[20480]{0}', space=vmem, size = 0x5000, scoped, tag = 'output window, operand 0, single buffered']
    %7 = vsyncpa [#allocation3], 0
    %8 = vsyncpa [#allocation6], 0
    %9 = vsyncpa [#allocation4], 0
    // Predicated region
    $region2: #{tpu_custom_call.1} parent=1 // pred_check
      _
    $region3: #{tpu_custom_call.1} parent=1 // pred_check_branch
      %11 = sbr.rel (0) target = $region5
    $region4: #{tpu_custom_call.1} parent=1 // pred_region
      %s12 = sadd.s32 0, 0
      %p13 = scmp.lt.s32.totalorder %s12, 0
      %s14 = scalar_select %p13, %s12, 0
      %s15 = smul.u32 2, %s14
      %s17 = ssub.s32 256, 256
      %18 = vsyncadd [#allocation3], %s17
      %s19 = smul.addr %s15, 128
      %s20 = scalar_lea.hbm %s0, %s19
      %s21 = sshll.u32 [#allocation2], 4
      %s22 = int_to_ptr.vmem [resolvable:$true] %s21
      %27 = dma.hbm_to_vmem [thread:$0]  %s20, 256, %s22, [#allocation3], 128, 128, 8
    $region5: #{tpu_custom_call.1} parent=1 // pred_fallthru
      _
    // Predicated region
    $region6: #{tpu_custom_call.1} parent=1 // pred_check
      _
    $region7: #{tpu_custom_call.1} parent=1 // pred_check_branch
      %29 = sbr.rel (0) target = $region9
    $region8: #{tpu_custom_call.1} parent=1 // pred_region
      %s30 = sadd.s32 0, 0
      %p31 = scmp.lt.s32.totalorder %s30, 0
      %s32 = scalar_select %p31, %s30, 0
      %s33 = smul.u32 2, %s32
      %s35 = ssub.s32 256, 256
      %36 = vsyncadd [#allocation6], %s35
      %s37 = smul.addr %s33, 128
      %s38 = scalar_lea.hbm %s1, %s37
      %s39 = sshll.u32 [#allocation5], 4
      %s40 = int_to_ptr.vmem [resolvable:$true] %s39
      %45 = dma.hbm_to_vmem [thread:$0]  %s38, 256, %s40, [#allocation6], 128, 128, 8
    $region9: #{tpu_custom_call.1} parent=1 // pred_fallthru
      _
    // Predicated region
    $region10: #{tpu_custom_call.1} parent=1 // pred_check
      _
    $region11: #{tpu_custom_call.1} parent=1 // pred_check_branch
      %47 = sbr.rel (0) target = $region13
    $region12: #{tpu_custom_call.1} parent=1 // pred_region
      %48 = dma.done [#allocation3], 256
    $region13: #{tpu_custom_call.1} parent=1 // pred_fallthru
      _
    // Predicated region
    $region14: #{tpu_custom_call.1} parent=1 // pred_check
      _
    $region15: #{tpu_custom_call.1} parent=1 // pred_check_branch
      %50 = sbr.rel (0) target = $region17
    $region16: #{tpu_custom_call.1} parent=1 // pred_region
      %51 = dma.done [#allocation6], 256
    $region17: #{tpu_custom_call.1} parent=1 // pred_fallthru
      _
    %s52 = sadd.s32 0, 0
    %p53 = scmp.lt.s32.totalorder %s52, 0
    %s54 = scalar_select %p53, %s52, 0
    %s55 = smul.u32 2, %s54
    %s56 = sadd.s32 0, 0
    %p57 = scmp.lt.s32.totalorder %s56, 0
    %s58 = scalar_select %p57, %s56, 0
    %s59 = smul.u32 2, %s58
    %p60 = scmp.eq.s32.totalorder 0, 0
    // Predicated region
    $region18: #{tpu_custom_call.1} parent=1 // pred_check
      %p61 = pneg %p60
    $region19: #{tpu_custom_call.1} parent=1 // pred_check_branch
      %63 = sbr.rel (%p61) target = $region21
    $region20: #{tpu_custom_call.1} parent=1 // pred_region
      %64 = vst [vmem:[#allocation7] sm:$0xff] 0.0
      %65 = vst [vmem:[#allocation7 + $0x8] sm:$0xff] 0.0
      %66 = vst [vmem:[#allocation7 + $0x10] sm:$0xff] 0.0
      %67 = vst [vmem:[#allocation7 + $0x18] sm:$0xff] 0.0
      %68 = vst [vmem:[#allocation7 + $0x20] sm:$0xff] 0.0
    $region21: #{tpu_custom_call.1} parent=1 // pred_fallthru
      _
    %s69 = sadd.s32 0, 0
    %s70 = smul.u32 %s69, 16
    %s71 = ssub.s32 16, %s70
    %v72 = vlaneseq
    %v73 = vshrl.u32 %v72, 7
    %v74 = vadd.s32 %v73, 8
    %v75 = vstv %s71
    %vm76 = vcmp.lt.s32.totalorder %v73, %v75
    %vm77 = vcmp.lt.s32.totalorder %v74, %v75
    %v78 = vld [vmem:[#allocation2] sm:$0xff]
    %v79 = vld [vmem:[#allocation2 + $0x8] sm:$0xff]
    %v80 = vsel %vm76, %v78, 0.0
    %v81 = vsel %vm77, %v79, 0.0
    %v82 = vld [vmem:[#allocation5] sm:$0xff]
    %v83 = vld [vmem:[#allocation5 + $0x8] sm:$0xff]
    %v84 = vsel %vm76, %v82, 0.0
    %v85 = vsel %vm77, %v83, 0.0
    %v86 = vld [vmem:[#allocation7] sm:$0xff]
    %v87 = vadd.f32 %v80, %v81
    %v88 = vadd.f32 %v86, %v87
    %89 = vst [vmem:[#allocation7] sm:$0xff] %v88
    %s90 = scalar_lea.vmem [#allocation7], 8
    %v91 = vld [vmem:[%s90] sm:$0xff]
    %v92 = vadd.f32 %v84, %v85
    %v93 = vadd.f32 %v91, %v92
    %94 = vst [vmem:[%s90] sm:$0xff] %v93
    %s95 = scalar_lea.vmem [#allocation7], 16
    %v96 = vld [vmem:[%s95] sm:$0xff]
    %v97 = vmul.f32 %v80, %v84
    %v98 = vmul.f32 %v81, %v85
    %v99 = vadd.f32 %v97, %v98
    %v100 = vadd.f32 %v96, %v99
    %101 = vst [vmem:[%s95] sm:$0xff] %v100
    %s102 = scalar_lea.vmem [#allocation7], 24
    %v103 = vld [vmem:[%s102] sm:$0xff]
    %v104 = vmul.f32 %v80, %v80
    %v105 = vmul.f32 %v81, %v81
    %v106 = vadd.f32 %v104, %v105
    %v107 = vadd.f32 %v103, %v106
    %108 = vst [vmem:[%s102] sm:$0xff] %v107
    %s109 = scalar_lea.vmem [#allocation7], 32
    %v110 = vld [vmem:[%s109] sm:$0xff]
    %v111 = vmul.f32 %v84, %v84
    %v112 = vmul.f32 %v85, %v85
    %v113 = vadd.f32 %v111, %v112
    %v114 = vadd.f32 %v110, %v113
    %115 = vst [vmem:[%s109] sm:$0xff] %v114
    // Predicated region
    $region22: #{tpu_custom_call.1} parent=1 // pred_check
      _
    $region23: #{tpu_custom_call.1} parent=1 // pred_check_branch
      %117 = sbr.rel (0) target = $region25
    $region24: #{tpu_custom_call.1} parent=1 // pred_region
      %s119 = ssub.s32 640, 640
      %120 = vsyncadd [#allocation4], %s119
      %s121 = sshll.u32 [#allocation7], 4
      %s122 = int_to_ptr.vmem [resolvable:$true] %s121
      %127 = dma.vmem_to_hbm [thread:$0]  %s122, 640, %s2, [#allocation4], 128, 128, 8
    $region25: #{tpu_custom_call.1} parent=1 // pred_fallthru
      _
    // Predicated region
    $region26: #{tpu_custom_call.1} parent=1 // pred_check
      _
    $region27: #{tpu_custom_call.1} parent=1 // pred_check_branch
      %129 = sbr.rel (0) target = $region29
    $region28: #{tpu_custom_call.1} parent=1 // pred_region
      %130 = dma.done [#allocation4], 640
    $region29: #{tpu_custom_call.1} parent=1 // pred_fallthru
      _
    %131 = vsyncpa [#allocation3], 1
    %132 = vsyncpa [#allocation6], 1
    %133 = vsyncpa [#allocation4], 1

</llo_original>
